<compile_context>
chip_gen: v7x
topology: tpu7x:2x2x1
jax: 0.10.0
libtpu: 0.0.40
codegen_flags: <defaults>
</compile_context>

<pallas_src>
import functools

import jax
import jax.numpy as jnp
from jax import lax
from jax.experimental import pallas as pl
from jax.experimental.pallas import tpu as pltpu


# ----------------------------------------------------------------------------- helpers

def _round_up(x, m):
    return ((x + m - 1) // m) * m


def _fused_dims(ob_dim, output_size, n_linear, size):
    """Layer widths of the fused (target||predictor) network."""
    if n_linear == 1:
        return (ob_dim, output_size)
    return tuple([ob_dim] + [2 * size] * (n_linear - 1) + [output_size])


def _slab_layout(dims):
    """Row/lane layout of the single packed parameter slab (8-row aligned segments)."""
    lane = _round_up(max(dims[1:]), 128)
    w_off, r = [], 0
    for i in range(len(dims) - 1):
        w_off.append(r)
        r += _round_up(dims[i], 8)          # weight i occupies rows [w_off[i], w_off[i]+dims[i])
    b_off = r                               # bias of layer i lives in row b_off + i
    r += _round_up(len(dims) - 1, 8)
    return lane, tuple(w_off), b_off, r


def pack_fused_params(f_params, f_hat_params):
    """Fuse target+predictor MLPs and pack everything into one (rows, lane) f32 slab."""
    # Mirror `f_out = self.f(ob_no).detach()` -- no gradient into the frozen target net.
    f_params = tuple(lax.stop_gradient(p) for p in f_params)

    n_lin = len(f_params) // 2
    ob_dim = f_params[0].shape[0]
    output_size = f_params[-2].shape[1]
    size = f_params[0].shape[1] if n_lin > 1 else output_size
    dims = _fused_dims(ob_dim, output_size, n_lin, size)
    lane, w_off, b_off, total_rows = _slab_layout(dims)

    fused = []
    for i in range(n_lin):
        fw, fb = f_params[2 * i], f_params[2 * i + 1]
        gw, gb = f_hat_params[2 * i], f_hat_params[2 * i + 1]
        first, last = (i == 0), (i == n_lin - 1)
        if first and last:                      # n_layers == 0 corner case
            w, b = fw - gw, fb - gb
        elif first:                             # concat along output features
            w = jnp.concatenate([fw, gw], axis=1)
            b = jnp.concatenate([fb, gb], axis=1)
        elif last:                              # diff-fused final layer
            w = jnp.concatenate([fw, -gw], axis=0)
            b = fb - gb
        else:                                   # block-diagonal hidden layer
            zfg = jnp.zeros((fw.shape[0], gw.shape[1]), fw.dtype)
            zgf = jnp.zeros((gw.shape[0], fw.shape[1]), fw.dtype)
            w = jnp.block([[fw, zfg], [zgf, gw]])
            b = jnp.concatenate([fb, gb], axis=1)
        fused.append((w, b))

    slab = jnp.zeros((total_rows, lane), jnp.float32)
    for i, (w, b) in enumerate(fused):
        slab = slab.at[w_off[i]:w_off[i] + w.shape[0], :w.shape[1]].set(
            w.astype(jnp.float32))
        slab = slab.at[b_off + i, :b.shape[1]].set(b[0].astype(jnp.float32))
    return slab, dims, w_off, b_off, total_rows, lane


# ----------------------------------------------------------------------------- kernel

_OUT_LANE = 128  # lane-dense partial-sum output tile width


def _rnd_kernel(x_ref, p_ref, out_ref, *, dims, w_off, b_off,
                n_total, tile_n, use_bf16):
    """One batch tile of the fused RND forward.

    x_ref  : (tile_n, ob_dim)            observation tile (f32)
    p_ref  : (total_rows, lane)          packed fused parameters (f32)
    out_ref: (1, 8, _OUT_LANE)           per-tile partial sum of squared diffs (broadcast)
    """
    pid = pl.program_id(0)
    n_lin = len(dims) - 1

    h = x_ref[...]                                             # f32 activations
    for i in range(n_lin):
        in_d, out_d = dims[i], dims[i + 1]
        w = p_ref[pl.ds(w_off[i], in_d), pl.ds(0, out_d)]      # (in_d, out_d)
        b = p_ref[pl.ds(b_off + i, 1), pl.ds(0, out_d)]        # (1, out_d)
        if use_bf16:                                           # MXU operands only
            lhs, rhs = h.astype(jnp.bfloat16), w.astype(jnp.bfloat16)
        else:
            lhs, rhs = h, w
        y = jnp.dot(lhs, rhs, preferred_element_type=jnp.float32) + b
        h = jnp.tanh(y) if i < n_lin - 1 else y                # tanh / bias stay f32

    # h == f(x) - f_hat(x) for this tile, shape (tile_n, output_size).
    row = lax.broadcasted_iota(jnp.int32, h.shape, 0) + pid * tile_n
    sq = jnp.where(row < n_total, h * h, 0.0)                  # mask batch padding rows
    psum = jnp.sum(sq)
    out_ref[...] = jnp.full(out_ref.shape, psum, dtype=jnp.float32)


# ----------------------------------------------------------------------------- wrapper

@functools.partial(jax.jit, static_argnames=("tile_n", "use_bf16"))
def rnd_forward(ob_no, f_params, f_hat_params, *, tile_n=128, use_bf16=False):
    """Scalar RND error sqrt(mean((f(ob) - f_hat(ob))**2))."""
    assert tile_n % 8 == 0
    n, ob_dim = ob_no.shape
    output_size = f_params[-2].shape[1]

    slab, dims, w_off, b_off, total_rows, lane = pack_fused_params(f_params, f_hat_params)

    num_tiles = pl.cdiv(n, tile_n)
    n_pad = num_tiles * tile_n
    ob_pad = jnp.pad(ob_no.astype(jnp.float32), ((0, n_pad - n), (0, 0)))

    # Advisory cost estimate so XLA schedules sensibly around the custom call.
    mm_flops = 2 * n_pad * sum(dims[i] * dims[i + 1] for i in range(len(dims) - 1))
    transcend = n_pad * sum(dims[1:-1])
    bytes_acc = ob_pad.size * 4 + slab.size * 4 + num_tiles * 8 * _OUT_LANE * 4

    kernel = functools.partial(
        _rnd_kernel, dims=dims, w_off=w_off, b_off=b_off,
        n_total=n, tile_n=tile_n, use_bf16=use_bf16)

    partial_sums = pl.pallas_call(
        kernel,
        out_shape=jax.ShapeDtypeStruct((num_tiles, 8, _OUT_LANE), jnp.float32),
        grid_spec=pltpu.PrefetchScalarGridSpec(
            num_scalar_prefetch=0,
            grid=(num_tiles,),
            in_specs=[
                pl.BlockSpec((tile_n, ob_dim), lambda i: (i, 0)),       # batch-tiled obs
                pl.BlockSpec((total_rows, lane), lambda i: (0, 0)),     # resident param slab
            ],
            out_specs=pl.BlockSpec((1, 8, _OUT_LANE), lambda i: (i, 0, 0)),
        ),
        compiler_params=pltpu.CompilerParams(
            dimension_semantics=("parallel",)),                         # v7x: 2 TCs split batch
        cost_estimate=pl.CostEstimate(
            flops=mm_flops, transcendentals=transcend, bytes_accessed=bytes_acc),
    )(ob_pad, slab)

    total = jnp.sum(partial_sums[:, 0, 0])
    return jnp.sqrt(total / (n * output_size))


# ----------------------------------------------------------------------------- reference / params

def build_mlp_params(key, ob_dim, output_size, n_layers, size, init):
    """Parameter construction matching build_mlp's layer shapes.

    init='uniform' ~ init_method_1 (U[0,1));  init='normal' ~ init_method_2 (N(0,1)).
    Weights are (in, out) (pre-transposed); biases are (1, out).
    """
    dims = [ob_dim] + [size] * n_layers + [output_size]
    params = []
    for i in range(len(dims) - 1):
        key, wk, bk = jax.random.split(key, 3)
        if init == "uniform":
            w = jax.random.uniform(wk, (dims[i], dims[i + 1]), jnp.float32)
            b = jax.random.uniform(bk, (1, dims[i + 1]), jnp.float32)
        else:
            w = jax.random.normal(wk, (dims[i], dims[i + 1]), jnp.float32)
            b = jax.random.normal(bk, (1, dims[i + 1]), jnp.float32)
        params += [w, b]
    return tuple(params)


def reference_forward(ob_no, f_params, f_hat_params):
    """Pure-JAX reference (mirrors the PyTorch forward)."""
    def mlp(x, p):
        n_lin = len(p) // 2
        h = x
        for i in range(n_lin):
            h = h @ p[2 * i] + p[2 * i + 1]
            if i < n_lin - 1:
                h = jnp.tanh(h)
        return h
    d = mlp(ob_no, f_params) - mlp(ob_no, f_hat_params)
    return jnp.sqrt(jnp.mean(d * d))


# ----------------------------------------------------------------------------- main

if __name__ == "__main__":
    batch = 200            # exercises 2 batch tiles + row masking (200 = 128 + 72)
    ob_dim = 16            # hparams['ob_dim']
    rnd_output_size = 8    # hparams['rnd_output_size']
    rnd_n_layers = 2       # hparams['rnd_n_layers']
    rnd_size = 32          # hparams['rnd_size']

    key = jax.random.PRNGKey(0)
    kx, kf, kfh = jax.random.split(key, 3)

    ob_no = jax.random.normal(kx, (batch, ob_dim), jnp.float32)
    f_params = build_mlp_params(kf, ob_dim, rnd_output_size, rnd_n_layers,
                                rnd_size, init="uniform")     # init_method_1 (frozen target)
    f_hat_params = build_mlp_params(kfh, ob_dim, rnd_output_size, rnd_n_layers,
                                    rnd_size, init="normal")  # init_method_2 (predictor)

    ref = reference_forward(ob_no, f_params, f_hat_params)

    # f32 matmul path (default): tight check against the reference.
    err = rnd_forward(ob_no, f_params, f_hat_params)
    jax.block_until_ready(err)
    assert jnp.allclose(err, ref, rtol=1e-4, atol=1e-4), (err, ref)

    # bf16 MXU-operand path (the v6e/v7x throughput option); elementwise stays f32.
    err_bf16 = rnd_forward(ob_no, f_params, f_hat_params, use_bf16=True)
    jax.block_until_ready(err_bf16)
    assert jnp.allclose(err_bf16, ref, rtol=5e-2, atol=5e-2), (err_bf16, ref)

    print("KERNEL_OK")
</pallas_src>

<mosaic_0001>
module attributes {stable_mosaic.version = 11 : i64} {
  func.func @_rnd_kernel(%arg0: i32, %arg1: memref<128x16xf32, #tpu.memory_space<vmem>>, %arg2: memref<152x128xf32, #tpu.memory_space<vmem>>, %arg3: memref<1x8x128xf32, #tpu.memory_space<vmem>>) attributes {dimension_semantics = [#tpu.dimension_semantics<parallel>], iteration_bounds = array<i64: 2>, scalar_prefetch = 0 : i64, scratch_operands = 0 : i64, tpu.core_type = #tpu.core_type<tc>, window_params = [{transform_indices = @transform_0, window_bounds = array<i64: 128, 16>}, {pipeline_mode = #tpu.pipeline_mode<synchronous>, transform_indices = @transform_1, window_bounds = array<i64: 152, 128>}, {transform_indices = @transform_2, window_bounds = array<i64: 1, 8, 128>}]} {
    %c0 = arith.constant 0 : index
    %c0_0 = arith.constant 0 : index
    %0 = vector.load %arg1[%c0, %c0_0] : memref<128x16xf32, #tpu.memory_space<vmem>>, vector<128x16xf32>
    %c0_1 = arith.constant 0 : index
    %c0_2 = arith.constant 0 : index
    %1 = vector.load %arg2[%c0_1, %c0_2] : memref<152x128xf32, #tpu.memory_space<vmem>>, vector<16x64xf32>
    %c144 = arith.constant 144 : index
    %c0_3 = arith.constant 0 : index
    %2 = vector.load %arg2[%c144, %c0_3] : memref<152x128xf32, #tpu.memory_space<vmem>>, vector<1x64xf32>
    %cst = arith.constant dense<0.000000e+00> : vector<128x64xf32>
    %3 = tpu.matmul %0, %1, %cst {dimension_numbers = #tpu.dot_dimension_numbers<[1], [0], [0], [1], [0, 0, 1, 1], [], []>} : vector<128x16xf32>, vector<16x64xf32>, vector<128x64xf32> -> vector<128x64xf32>
    %4 = vector.broadcast %2 : vector<1x64xf32> to vector<128x64xf32>
    %5 = arith.addf %3, %4 : vector<128x64xf32>
    %6 = math.tanh %5 : vector<128x64xf32>
    %c16 = arith.constant 16 : index
    %c0_4 = arith.constant 0 : index
    %7 = vector.load %arg2[%c16, %c0_4] : memref<152x128xf32, #tpu.memory_space<vmem>>, vector<64x64xf32>
    %c145 = arith.constant 145 : index
    %c0_5 = arith.constant 0 : index
    %8 = vector.load %arg2[%c145, %c0_5] : memref<152x128xf32, #tpu.memory_space<vmem>>, vector<1x64xf32>
    %cst_6 = arith.constant dense<0.000000e+00> : vector<128x64xf32>
    %9 = tpu.matmul %6, %7, %cst_6 {dimension_numbers = #tpu.dot_dimension_numbers<[1], [0], [0], [1], [0, 0, 1, 1], [], []>} : vector<128x64xf32>, vector<64x64xf32>, vector<128x64xf32> -> vector<128x64xf32>
    %10 = vector.broadcast %8 : vector<1x64xf32> to vector<128x64xf32>
    %11 = arith.addf %9, %10 : vector<128x64xf32>
    %12 = math.tanh %11 : vector<128x64xf32>
    %c80 = arith.constant 80 : index
    %c0_7 = arith.constant 0 : index
    %13 = vector.load %arg2[%c80, %c0_7] : memref<152x128xf32, #tpu.memory_space<vmem>>, vector<64x8xf32>
    %c146 = arith.constant 146 : index
    %c0_8 = arith.constant 0 : index
    %14 = vector.load %arg2[%c146, %c0_8] : memref<152x128xf32, #tpu.memory_space<vmem>>, vector<1x8xf32>
    %cst_9 = arith.constant dense<0.000000e+00> : vector<128x8xf32>
    %15 = tpu.matmul %12, %13, %cst_9 {dimension_numbers = #tpu.dot_dimension_numbers<[1], [0], [0], [1], [0, 0, 1, 1], [], []>} : vector<128x64xf32>, vector<64x8xf32>, vector<128x8xf32> -> vector<128x8xf32>
    %16 = vector.broadcast %14 : vector<1x8xf32> to vector<128x8xf32>
    %17 = arith.addf %15, %16 : vector<128x8xf32>
    %18 = tpu.iota {dimensions = array<i32: 0>} : vector<128x8xi32>
    %c128_i32 = arith.constant 128 : i32
    %19 = arith.muli %arg0, %c128_i32 : i32
    %20 = vector.broadcast %19 : i32 to vector<128x8xi32>
    %21 = arith.addi %18, %20 : vector<128x8xi32>
    %c200_i32 = arith.constant 200 : i32
    %22 = vector.broadcast %c200_i32 : i32 to vector<128x8xi32>
    %23 = arith.cmpi slt, %21, %22 : vector<128x8xi32>
    %24 = arith.mulf %17, %17 : vector<128x8xf32>
    %cst_10 = arith.constant 0.000000e+00 : f32
    %25 = vector.broadcast %cst_10 : f32 to vector<128x8xf32>
    %26 = arith.select %23, %24, %25 : vector<128x8xi1>, vector<128x8xf32>
    %27 = vector.shape_cast %26 : vector<128x8xf32> to vector<1x128x8xf32>
    %cst_11 = arith.constant dense<0.000000e+00> : vector<1xf32>
    %28 = vector.multi_reduction <add>, %27, %cst_11 [1, 2] : vector<1x128x8xf32> to vector<1xf32>
    %29 = vector.shape_cast %28 : vector<1xf32> to vector<1x1x1xf32>
    %30 = vector.extract %29[0, 0, 0] : f32 from vector<1x1x1xf32>
    %31 = vector.broadcast %30 : f32 to vector<1x8x128xf32>
    %c0_12 = arith.constant 0 : index
    %c0_13 = arith.constant 0 : index
    %c0_14 = arith.constant 0 : index
    %32 = vector.load %arg3[%c0_12, %c0_13, %c0_14] : memref<1x8x128xf32, #tpu.memory_space<vmem>>, vector<1x8x128xf32>
    tpu.vector_store %arg3[%c0_12, %c0_13, %c0_14], %31 {strides = array<i32>} : memref<1x8x128xf32, #tpu.memory_space<vmem>>, vector<1x8x128xf32>,
    return
  }
  func.func @transform_0(%arg0: i32) -> (i32, i32) {
    %c0_i32 = arith.constant 0 : i32
    %c0_i32_0 = arith.constant 0 : i32
    return %arg0, %c0_i32 : i32, i32
  }
  func.func @transform_1(%arg0: i32) -> (i32, i32) {
    %c0_i32 = arith.constant 0 : i32
    %c0_i32_0 = arith.constant 0 : i32
    %c0_i32_1 = arith.constant 0 : i32
    return %c0_i32, %c0_i32_0 : i32, i32
  }
  func.func @transform_2(%arg0: i32) -> (i32, i32, i32) {
    %c0_i32 = arith.constant 0 : i32
    %c0_i32_0 = arith.constant 0 : i32
    %c0_i32_1 = arith.constant 0 : i32
    return %arg0, %c0_i32, %c0_i32_0 : i32, i32, i32
  }
}

</mosaic_0001>

<llo_original>
// kernel: neg.1
$region0: #{neg.1}
  #allocation0 [shape = 's32[1]{0}', space=sflag, size = 0x4, scoped, tag = 'scoped memory for neg.1']
  %s0 = inlined_call_operand.vmem [shape: f32[32,8], index: 0, kind: input, shape index: {}]
  %s1 = inlined_call_operand.vmem [shape: f32[32,8], index: 1, kind: output, shape index: {}]
  %v2 = vld [vmem:[%s0] sm:$0xff]
  %3 = xla_tuple %v2
  %4 = xla_tuple %3
  %v5 = vxor.u32 %v2, 2147483648
  %6 = xla_tuple %v5
  %7 = vst [vmem:[%s1] sm:$0xff] %v5

// kernel: sub.1
$region0: #{sub.1}
  #allocation0 [shape = 's32[1]{0}', space=sflag, size = 0x4, scoped, tag = 'scoped memory for sub.1']
  %s0 = inlined_call_operand.vmem [shape: f32[1,8], index: 0, kind: input, shape index: {}]
  %s1 = inlined_call_operand.vmem [shape: f32[1,8], index: 1, kind: input, shape index: {}]
  %s2 = inlined_call_operand.vmem [shape: f32[1,8], index: 2, kind: output, shape index: {}]
  %v3 = vld [vmem:[%s0] sm:$0x1]
  %v4 = vld [vmem:[%s1] sm:$0x1]
  %5 = xla_tuple %v3, %v4
  %6 = xla_tuple %5
  %v7 = vsub.f32 %v3, %v4
  %8 = xla_tuple %v7
  %9 = vst [vmem:[%s2] sm:$0x1] %v7

// kernel: rnd_forward.1
$region0: #{rnd_forward.1}
  #allocation0 [shape = 'u32[]', space=smem, size = 0x4, offset = 0x4, fixed_abs, tag = 'smem constant byte address 0x4 - core index']
  #allocation1 [shape = 'u32[144,128]{1,0:T(1,128)}', space=vmem, size = 0x12000, scoped, tag = 'internal scratch']
  %s0 = inlined_call_operand.vmem [shape: f32[256,16], index: 0, kind: input, shape index: {}]
  %s1 = inlined_call_operand.vmem [shape: f32[152,128], index: 1, kind: input, shape index: {}]
  %s2 = inlined_call_operand.vmem [shape: f32[2,8,128], index: 2, kind: output, shape index: {}]
  %s3 = sld [smem:[#allocation0]]
  $region41: #{rnd_forward.1} parent=0
    _
  %s5 = ssub.s32 1, %s3
  %s6 = scalar_select 0, %s5, %s3
  loop: start=0, step=1, limit=4
  $region2: #{rnd_forward.1} parent=0 // loop_pre_header
    _
  $region3: #{rnd_forward.1} parent=0 // loop_header
    %s8 = sphi 0, %s12
    %p9 = scmp.ge.s32.totalorder %s8, 4
    %s18 = sphi 0, %s20
    %s21 = sphi 0, %s18
    %s22 = sphi 0, %s21
    %s38 = sphi 0, %s22
    %s42 = sphi 0, %s42
    %s44 = sphi 0, %s42
    %s45 = sphi 0, %s44
    %s59 = sphi 0, %s45
    %s65 = sphi 0, %s67
    %s68 = sphi 0, %s65
    %s69 = sphi 0, %s68
    %s85 = sphi 0, %s69
  $region4: #{rnd_forward.1} parent=0 // loop_header_branch
    %11 = sbr.rel (%p9) target = $region8
  $region5: #{rnd_forward.1} parent=0 // loop_body
    %s13 = ssub.s32 %s8, 1
    %s14 = ssub.s32 %s8, 2
    %s15 = sadd.s32 %s8, 1
    %s16 = ssub.s32 %s8, %s15
    %p17 = scmp.eq.s32.totalorder %s16, 0
    %s19 = sadd.s32 %s18, 1
    %s20 = scalar_select %p17, %s18, %s19
    %p23 = pneg %p17
    %p24 = scmp.eq.s32.totalorder %s8, 1
    %p25 = por %p23, %p24
    %p26 = scmp.ne.s32.totalorder %s18, %s21
    %p27 = scmp.eq.s32.totalorder %s8, 0
    %p28 = por %p26, %p27
    %p29 = scmp.ne.s32.totalorder %s18, %s21
    %p30 = scmp.eq.s32.totalorder %s13, 1
    %p31 = por %p29, %p30
    %p32 = scmp.ne.s32.totalorder %s21, %s22
    %p33 = scmp.eq.s32.totalorder %s13, 0
    %p34 = por %p32, %p33
    %p35 = scmp.ne.s32.totalorder %s21, %s22
    %p36 = scmp.eq.s32.totalorder %s14, 1
    %p37 = por %p35, %p36
    %p39 = scmp.ne.s32.totalorder %s22, %s38
    %p40 = scmp.eq.s32.totalorder %s14, 0
    %p41 = por %p39, %p40
    %s43 = sadd.s32 %s42, 1
    %p46 = scmp.eq.s32.totalorder %s8, 1
    %p47 = scmp.ne.s32.totalorder %s42, %s44
    %p48 = scmp.eq.s32.totalorder %s8, 0
    %p49 = por %p47, %p48
    %p50 = scmp.ne.s32.totalorder %s42, %s44
    %p51 = scmp.eq.s32.totalorder %s13, 1
    %p52 = por %p50, %p51
    %p53 = scmp.ne.s32.totalorder %s44, %s45
    %p54 = scmp.eq.s32.totalorder %s13, 0
    %p55 = por %p53, %p54
    %p56 = scmp.ne.s32.totalorder %s44, %s45
    %p57 = scmp.eq.s32.totalorder %s14, 1
    %p58 = por %p56, %p57
    %p60 = scmp.ne.s32.totalorder %s45, %s59
    %p61 = scmp.eq.s32.totalorder %s14, 0
    %p62 = por %p60, %p61
    %s63 = ssub.s32 %s8, %s15
    %p64 = scmp.eq.s32.totalorder %s63, 0
    %s66 = sadd.s32 %s65, 1
    %s67 = scalar_select %p64, %s65, %s66
    %p70 = pneg %p64
    %p71 = scmp.eq.s32.totalorder %s8, 1
    %p72 = por %p70, %p71
    %p73 = scmp.ne.s32.totalorder %s65, %s68
    %p74 = scmp.eq.s32.totalorder %s8, 0
    %p75 = por %p73, %p74
    %p76 = scmp.ne.s32.totalorder %s65, %s68
    %p77 = scmp.eq.s32.totalorder %s13, 1
    %p78 = por %p76, %p77
    %p79 = scmp.ne.s32.totalorder %s68, %s69
    %p80 = scmp.eq.s32.totalorder %s13, 0
    %p81 = por %p79, %p80
    %p82 = scmp.ne.s32.totalorder %s68, %s69
    %p83 = scmp.eq.s32.totalorder %s14, 1
    %p84 = por %p82, %p83
    %p86 = scmp.ne.s32.totalorder %s69, %s85
    %p87 = scmp.eq.s32.totalorder %s14, 0
    %p88 = por %p86, %p87
    %p89 = scmp.le.s32.totalorder 1, %s8
    %p90 = scmp.lt.s32.totalorder %s8, 3
    %p91 = pnand %p89, %p90
    %p92 = pneg %p91
    // Predicated region
    $region9: #{rnd_forward.1} parent=5 // pred_check
      _
    $region10: #{rnd_forward.1} parent=5 // pred_check_branch
      %94 = sbr.rel (%p91) target = $region12
    $region11: #{rnd_forward.1} parent=5 // pred_region
      %s95 = ssub.s32 %s8, 1
      // Predicated region
      $region13: #{rnd_forward.1} parent=11 // pred_check
        %p96 = pneg %p55
      $region14: #{rnd_forward.1} parent=11 // pred_check_branch
        %98 = sbr.rel (%p96) target = $region16
      $region15: #{rnd_forward.1} parent=11 // pred_region
        _
      $region16: #{rnd_forward.1} parent=11 // pred_fallthru
        _
    $region12: #{rnd_forward.1} parent=5 // pred_fallthru
      _
    %p99 = scmp.lt.s32.totalorder %s8, 2
    // Predicated region
    $region17: #{rnd_forward.1} parent=5 // pred_check
      %p100 = pneg %p99
    $region18: #{rnd_forward.1} parent=5 // pred_check_branch
      %102 = sbr.rel (%p100) target = $region20
    $region19: #{rnd_forward.1} parent=5 // pred_region
      // Predicated region
      $region21: #{rnd_forward.1} parent=19 // pred_check
        %p103 = pneg %p28
      $region22: #{rnd_forward.1} parent=19 // pred_check_branch
        %105 = sbr.rel (%p103) target = $region24
      $region23: #{rnd_forward.1} parent=19 // pred_region
        %s106 = smul.u32 16, %s8
        %p107 = scmp.lt.s32.totalorder %s106, 31
        %s108 = scalar_select %p107, %s106, 31
        %s109 = smul.addr %s108, 8
        %s110 = scalar_lea.vmem %s0, %s109
        %s111 = smul.u32 16, %s8
      $region24: #{rnd_forward.1} parent=19 // pred_fallthru
        _
    $region20: #{rnd_forward.1} parent=5 // pred_fallthru
      _
    %p112 = scmp.le.s32.totalorder 1, %s8
    %p113 = scmp.lt.s32.totalorder %s8, 3
    %p114 = pnand %p112, %p113
    %p115 = pneg %p114
    // Predicated region
    $region25: #{rnd_forward.1} parent=5 // pred_check
      _
    $region26: #{rnd_forward.1} parent=5 // pred_check_branch
      %117 = sbr.rel (%p114) target = $region28
    $region27: #{rnd_forward.1} parent=5 // pred_region
      %s118 = ssub.s32 %s8, 1
      %s119 = smul.u32 16, %s13
      %p120 = scmp.lt.s32.totalorder %s119, 31
      %s121 = scalar_select %p120, %s119, 31
      %s122 = smul.addr %s121, 8
      %s123 = scalar_lea.vmem %s0, %s122
      %p124 = pneg %p34
      %p125 = pneg %p31
      %p126 = pneg %p55
      %p127 = pneg %p52
      %p128 = pneg %p81
      %p129 = pneg %p78
      %p130 = scmp.lt.s32.totalorder %s13, 1
      %s131 = scalar_select %p130, %s13, 1
      %s132 = smul.addr %s131, 8
      %s133 = scalar_lea.vmem %s2, %s132
      %s134 = smul.u32 16, %s13
      %p135 = scmp.lt.s32.totalorder %s134, 31
      %s136 = scalar_select %p135, %s134, 31
      %s137 = smul.addr %s136, 8
      %s138 = scalar_lea.vmem %s0, %s137
      %s139 = smul.u32 16, %s13
      %p140 = scmp.lt.s32.totalorder %s13, 1
      %s141 = scalar_select %p140, %s13, 1
      %s142 = smul.addr %s141, 8
      %s143 = scalar_lea.vmem %s2, %s142
      %v144 = vld [vmem:[%s138] sm:$0xff]
      %v145 = vld [vmem:[%s138 + $0x8] sm:$0xff]
      %v146 = vld [vmem:[%s138 + $0x10] sm:$0xff]
      %v147 = vld [vmem:[%s138 + $0x18] sm:$0xff]
      %v148 = vld [vmem:[%s138 + $0x20] sm:$0xff]
      %v149 = vld [vmem:[%s138 + $0x28] sm:$0xff]
      %v150 = vld [vmem:[%s138 + $0x30] sm:$0xff]
      %v151 = vld [vmem:[%s138 + $0x38] sm:$0xff]
      %v152 = vld [vmem:[%s138 + $0x40] sm:$0xff]
      %v153 = vld [vmem:[%s138 + $0x48] sm:$0xff]
      %v154 = vld [vmem:[%s138 + $0x50] sm:$0xff]
      %v155 = vld [vmem:[%s138 + $0x58] sm:$0xff]
      %v156 = vld [vmem:[%s138 + $0x60] sm:$0xff]
      %v157 = vld [vmem:[%s138 + $0x68] sm:$0xff]
      %v158 = vld [vmem:[%s138 + $0x70] sm:$0xff]
      %v159 = vld [vmem:[%s138 + $0x78] sm:$0xff]
      %v160 = vld [vmem:[%s1] sm:$0xff]
      %v161 = vld [vmem:[%s1 + $0x8] sm:$0xff]
      %v162 = vld [vmem:[%s1 + $0x90] sm:$0x1]
      %v163 = vlaneseq
      %v164 = vshrl.u32 %v163, 7
      %v165 = vsub.s32 0, %v164
      %v166 = vrot.slane %v162, %v165
      %vm167 = vcmask 130048
      %v169 = vsel %vm167, %v144, 0
      %v172 = vsel %vm167, %v145, 0
      %v175 = vsel %vm167, %v146, 0
      %v178 = vsel %vm167, %v147, 0
      %v181 = vsel %vm167, %v148, 0
      %v184 = vsel %vm167, %v149, 0
      %v187 = vsel %vm167, %v150, 0
      %v190 = vsel %vm167, %v151, 0
      %v193 = vsel %vm167, %v152, 0
      %v196 = vsel %vm167, %v153, 0
      %v199 = vsel %vm167, %v154, 0
      %v202 = vsel %vm167, %v155, 0
      %v205 = vsel %vm167, %v156, 0
      %v208 = vsel %vm167, %v157, 0
      %v211 = vsel %vm167, %v158, 0
      %v214 = vsel %vm167, %v159, 0
      %216 = vmatprep.subr.mxu0 0.0
      %217 = vmatpush1.msra.mxu0 %v160
      %218 = vmatprep.subr.mxu0 0.0
      %219 = vmatpush1.msra.mxu0 %v161
      %220 = vmatprep.subr.mxu0 0.0
      %221 = vmatpush1.msra.mxu0 0.0
      %222 = vmatprep.subr.mxu0 0.0
      %223 = vmatpush1.msra.mxu0 0.0
      %224 = vmatprep.subr.mxu0 0.0
      %225 = vmatpush1.msra.mxu0 0.0
      %226 = vmatprep.subr.mxu0 0.0
      %227 = vmatpush1.msra.mxu0 0.0
      %228 = vmatprep.subr.mxu0 0.0
      %229 = vmatpush1.msra.mxu0 0.0
      %230 = vmatprep.subr.mxu0 0.0
      %231 = vmatpush1.msra.mxu0 0.0
      %232 = vmatprep.subr.mxu0 0.0
      %233 = vmatpush1.msra.mxu0 0.0
      %234 = vmatprep.subr.mxu0 0.0
      %235 = vmatpush1.msra.mxu0 0.0
      %236 = vmatprep.subr.mxu0 0.0
      %237 = vmatpush1.msra.mxu0 0.0
      %238 = vmatprep.subr.mxu0 0.0
      %239 = vmatpush1.msra.mxu0 0.0
      %240 = vmatprep.subr.mxu0 0.0
      %241 = vmatpush1.msra.mxu0 0.0
      %242 = vmatprep.subr.mxu0 0.0
      %243 = vmatpush1.msra.mxu0 0.0
      %244 = vmatprep.subr.mxu0 0.0
      %245 = vmatpush1.msra.mxu0 0.0
      %246 = vmatprep.subr.mxu0 0.0
      %247 = vmatpush1.msra.mxu0 0.0
      %248 = vmatprep.subr.mxu0 0.0
      %249 = vmatpush1.msra.mxu0 0.0
      %250 = vmatprep.subr.mxu0 0.0
      %251 = vmatpush1.msra.mxu0 0.0
      %252 = vmatprep.subr.mxu0 0.0
      %253 = vmatpush1.msra.mxu0 0.0
      %254 = vmatprep.subr.mxu0 0.0
      %255 = vmatpush1.msra.mxu0 0.0
      %256 = vmatprep.subr.mxu0 0.0
      %257 = vmatpush1.msra.mxu0 0.0
      %258 = vmatprep.subr.mxu0 0.0
      %259 = vmatpush1.msra.mxu0 0.0
      %260 = vmatprep.subr.mxu0 0.0
      %261 = vmatpush1.msra.mxu0 0.0
      %262 = vmatprep.subr.mxu0 0.0
      %263 = vmatpush1.msra.mxu0 0.0
      %264 = vmatprep.subr.mxu0 0.0
      %265 = vmatpush1.msra.mxu0 0.0
      %266 = vmatprep.subr.mxu0 0.0
      %267 = vmatpush1.msra.mxu0 0.0
      %268 = vmatprep.subr.mxu0 0.0
      %269 = vmatpush1.msra.mxu0 0.0
      %270 = vmatprep.subr.mxu0 0.0
      %271 = vmatpush1.msra.mxu0 0.0
      %272 = vmatprep.subr.mxu0 0.0
      %273 = vmatpush1.msra.mxu0 0.0
      %274 = vmatprep.subr.mxu0 0.0
      %275 = vmatpush1.msra.mxu0 0.0
      %276 = vmatprep.subr.mxu0 0.0
      %277 = vmatpush1.msra.mxu0 0.0
      %278 = vmatprep.subr.mxu0 0.0
      %279 = vmatpush1.msra.mxu0 0.0
      %280 = vmatprep.mubr.f32.mxu0 0.0
      %281 = vmatmul.mubr.f32.gmra.mrb[0].mxu0 %v169
      %v282 = vpop.f32.mrb[0].mxu0
      %v283 = vadd.f32 %v166, %v282
      %v284 = vpop.f32.mrb[0].mxu0
      %285 = vmatprep.mubr.f32.mxu0 0.0
      %286 = vmatmul.mubr.f32.gmra.mrb[0].mxu0 %v172
      %v287 = vpop.f32.mrb[0].mxu0
      %v288 = vadd.f32 %v166, %v287
      %v289 = vpop.f32.mrb[0].mxu0
      %290 = vmatprep.mubr.f32.mxu0 0.0
      %291 = vmatmul.mubr.f32.gmra.mrb[0].mxu0 %v175
      %v292 = vpop.f32.mrb[0].mxu0
      %v293 = vadd.f32 %v166, %v292
      %v294 = vpop.f32.mrb[0].mxu0
      %295 = vmatprep.mubr.f32.mxu0 0.0
      %296 = vmatmul.mubr.f32.gmra.mrb[0].mxu0 %v178
      %v297 = vpop.f32.mrb[0].mxu0
      %v298 = vadd.f32 %v166, %v297
      %v299 = vpop.f32.mrb[0].mxu0
      %300 = vmatprep.mubr.f32.mxu0 0.0
      %301 = vmatmul.mubr.f32.gmra.mrb[0].mxu0 %v181
      %v302 = vpop.f32.mrb[0].mxu0
      %v303 = vadd.f32 %v166, %v302
      %v304 = vpop.f32.mrb[0].mxu0
      %305 = vmatprep.mubr.f32.mxu0 0.0
      %306 = vmatmul.mubr.f32.gmra.mrb[0].mxu0 %v184
      %v307 = vpop.f32.mrb[0].mxu0
      %v308 = vadd.f32 %v166, %v307
      %v309 = vpop.f32.mrb[0].mxu0
      %310 = vmatprep.mubr.f32.mxu0 0.0
      %311 = vmatmul.mubr.f32.gmra.mrb[0].mxu0 %v187
      %v312 = vpop.f32.mrb[0].mxu0
      %v313 = vadd.f32 %v166, %v312
      %v314 = vpop.f32.mrb[0].mxu0
      %315 = vmatprep.mubr.f32.mxu0 0.0
      %316 = vmatmul.mubr.f32.gmra.mrb[0].mxu0 %v190
      %v317 = vpop.f32.mrb[0].mxu0
      %v318 = vadd.f32 %v166, %v317
      %v319 = vpop.f32.mrb[0].mxu0
      %320 = vmatprep.mubr.f32.mxu0 0.0
      %321 = vmatmul.mubr.f32.gmra.mrb[0].mxu0 %v193
      %v322 = vpop.f32.mrb[0].mxu0
      %v323 = vadd.f32 %v166, %v322
      %v324 = vpop.f32.mrb[0].mxu0
      %325 = vmatprep.mubr.f32.mxu0 0.0
      %326 = vmatmul.mubr.f32.gmra.mrb[0].mxu0 %v196
      %v327 = vpop.f32.mrb[0].mxu0
      %v328 = vadd.f32 %v166, %v327
      %v329 = vpop.f32.mrb[0].mxu0
      %330 = vmatprep.mubr.f32.mxu0 0.0
      %331 = vmatmul.mubr.f32.gmra.mrb[0].mxu0 %v199
      %v332 = vpop.f32.mrb[0].mxu0
      %v333 = vadd.f32 %v166, %v332
      %v334 = vpop.f32.mrb[0].mxu0
      %335 = vmatprep.mubr.f32.mxu0 0.0
      %336 = vmatmul.mubr.f32.gmra.mrb[0].mxu0 %v202
      %v337 = vpop.f32.mrb[0].mxu0
      %v338 = vadd.f32 %v166, %v337
      %v339 = vpop.f32.mrb[0].mxu0
      %340 = vmatprep.mubr.f32.mxu0 0.0
      %341 = vmatmul.mubr.f32.gmra.mrb[0].mxu0 %v205
      %v342 = vpop.f32.mrb[0].mxu0
      %v343 = vadd.f32 %v166, %v342
      %v344 = vpop.f32.mrb[0].mxu0
      %345 = vmatprep.mubr.f32.mxu0 0.0
      %346 = vmatmul.mubr.f32.gmra.mrb[0].mxu0 %v208
      %v347 = vpop.f32.mrb[0].mxu0
      %v348 = vadd.f32 %v166, %v347
      %v349 = vpop.f32.mrb[0].mxu0
      %350 = vmatprep.mubr.f32.mxu0 0.0
      %351 = vmatmul.mubr.f32.gmra.mrb[0].mxu0 %v211
      %v352 = vpop.f32.mrb[0].mxu0
      %v353 = vadd.f32 %v166, %v352
      %v354 = vpop.f32.mrb[0].mxu0
      %355 = vmatprep.mubr.f32.mxu0 0.0
      %356 = vmatmul.mubr.f32.gmra.mrb[0].mxu0 %v214
      %v357 = vpop.f32.mrb[0].mxu0
      %v358 = vadd.f32 %v166, %v357
      %v359 = vpop.f32.mrb[0].mxu0
      %360 = vdwg.mxu0
      %v361 = vtanh.pop %v283
      %v362 = vtanh.pop %v288
      %v363 = vtanh.pop %v293
      %v364 = vtanh.pop %v298
      %v365 = vtanh.pop %v303
      %v366 = vtanh.pop %v308
      %v367 = vtanh.pop %v313
      %v368 = vtanh.pop %v318
      %v369 = vtanh.pop %v323
      %v370 = vtanh.pop %v328
      %v371 = vtanh.pop %v333
      %v372 = vtanh.pop %v338
      %v373 = vtanh.pop %v343
      %v374 = vtanh.pop %v348
      %v375 = vtanh.pop %v353
      %v376 = vtanh.pop %v358
      %v377 = vld [vmem:[%s1 + $0x10] sm:$0xff]
      %v378 = vld [vmem:[%s1 + $0x18] sm:$0xff]
      %v379 = vld [vmem:[%s1 + $0x20] sm:$0xff]
      %v380 = vld [vmem:[%s1 + $0x28] sm:$0xff]
      %v381 = vld [vmem:[%s1 + $0x30] sm:$0xff]
      %v382 = vld [vmem:[%s1 + $0x38] sm:$0xff]
      %v383 = vld [vmem:[%s1 + $0x40] sm:$0xff]
      %v384 = vld [vmem:[%s1 + $0x48] sm:$0xff]
      %v385 = vld [vmem:[%s1 + $0x91] sm:$0x1]
      %v386 = vlaneseq
      %v387 = vshrl.u32 %v386, 7
      %v388 = vsub.s32 0, %v387
      %v389 = vrot.slane %v385, %v388
      %vm390 = vcmask 523264
      %v392 = vsel %vm390, %v361, 0
      %v395 = vsel %vm390, %v362, 0
      %v398 = vsel %vm390, %v363, 0
      %v401 = vsel %vm390, %v364, 0
      %v404 = vsel %vm390, %v365, 0
      %v407 = vsel %vm390, %v366, 0
      %v410 = vsel %vm390, %v367, 0
      %v413 = vsel %vm390, %v368, 0
      %v416 = vsel %vm390, %v369, 0
      %v419 = vsel %vm390, %v370, 0
      %v422 = vsel %vm390, %v371, 0
      %v425 = vsel %vm390, %v372, 0
      %v428 = vsel %vm390, %v373, 0
      %v431 = vsel %vm390, %v374, 0
      %v434 = vsel %vm390, %v375, 0
      %v437 = vsel %vm390, %v376, 0
      %439 = vmatprep.subr.mxu0 0.0
      %440 = vmatpush1.msra.mxu0 %v377
      %441 = vmatprep.subr.mxu0 0.0
      %442 = vmatpush1.msra.mxu0 %v378
      %443 = vmatprep.subr.mxu0 0.0
      %444 = vmatpush1.msra.mxu0 %v379
      %445 = vmatprep.subr.mxu0 0.0
      %446 = vmatpush1.msra.mxu0 %v380
      %447 = vmatprep.subr.mxu0 0.0
      %448 = vmatpush1.msra.mxu0 %v381
      %449 = vmatprep.subr.mxu0 0.0
      %450 = vmatpush1.msra.mxu0 %v382
      %451 = vmatprep.subr.mxu0 0.0
      %452 = vmatpush1.msra.mxu0 %v383
      %453 = vmatprep.subr.mxu0 0.0
      %454 = vmatpush1.msra.mxu0 %v384
      %455 = vmatprep.subr.mxu0 0.0
      %456 = vmatpush1.msra.mxu0 0.0
      %457 = vmatprep.subr.mxu0 0.0
      %458 = vmatpush1.msra.mxu0 0.0
      %459 = vmatprep.subr.mxu0 0.0
      %460 = vmatpush1.msra.mxu0 0.0
      %461 = vmatprep.subr.mxu0 0.0
      %462 = vmatpush1.msra.mxu0 0.0
      %463 = vmatprep.subr.mxu0 0.0
      %464 = vmatpush1.msra.mxu0 0.0
      %465 = vmatprep.subr.mxu0 0.0
      %466 = vmatpush1.msra.mxu0 0.0
      %467 = vmatprep.subr.mxu0 0.0
      %468 = vmatpush1.msra.mxu0 0.0
      %469 = vmatprep.subr.mxu0 0.0
      %470 = vmatpush1.msra.mxu0 0.0
      %471 = vmatprep.subr.mxu0 0.0
      %472 = vmatpush1.msra.mxu0 0.0
      %473 = vmatprep.subr.mxu0 0.0
      %474 = vmatpush1.msra.mxu0 0.0
      %475 = vmatprep.subr.mxu0 0.0
      %476 = vmatpush1.msra.mxu0 0.0
      %477 = vmatprep.subr.mxu0 0.0
      %478 = vmatpush1.msra.mxu0 0.0
      %479 = vmatprep.subr.mxu0 0.0
      %480 = vmatpush1.msra.mxu0 0.0
      %481 = vmatprep.subr.mxu0 0.0
      %482 = vmatpush1.msra.mxu0 0.0
      %483 = vmatprep.subr.mxu0 0.0
      %484 = vmatpush1.msra.mxu0 0.0
      %485 = vmatprep.subr.mxu0 0.0
      %486 = vmatpush1.msra.mxu0 0.0
      %487 = vmatprep.subr.mxu0 0.0
      %488 = vmatpush1.msra.mxu0 0.0
      %489 = vmatprep.subr.mxu0 0.0
      %490 = vmatpush1.msra.mxu0 0.0
      %491 = vmatprep.subr.mxu0 0.0
      %492 = vmatpush1.msra.mxu0 0.0
      %493 = vmatprep.subr.mxu0 0.0
      %494 = vmatpush1.msra.mxu0 0.0
      %495 = vmatprep.subr.mxu0 0.0
      %496 = vmatpush1.msra.mxu0 0.0
      %497 = vmatprep.subr.mxu0 0.0
      %498 = vmatpush1.msra.mxu0 0.0
      %499 = vmatprep.subr.mxu0 0.0
      %500 = vmatpush1.msra.mxu0 0.0
      %501 = vmatprep.subr.mxu0 0.0
      %502 = vmatpush1.msra.mxu0 0.0
      %503 = vmatprep.mubr.f32.mxu0 0.0
      %504 = vmatmul.mubr.f32.gmra.mrb[0].mxu0 %v392
      %v505 = vpop.f32.mrb[0].mxu0
      %v506 = vadd.f32 %v389, %v505
      %v507 = vpop.f32.mrb[0].mxu0
      %508 = vmatprep.mubr.f32.mxu0 0.0
      %509 = vmatmul.mubr.f32.gmra.mrb[0].mxu0 %v395
      %v510 = vpop.f32.mrb[0].mxu0
      %v511 = vadd.f32 %v389, %v510
      %v512 = vpop.f32.mrb[0].mxu0
      %513 = vmatprep.mubr.f32.mxu0 0.0
      %514 = vmatmul.mubr.f32.gmra.mrb[0].mxu0 %v398
      %v515 = vpop.f32.mrb[0].mxu0
      %v516 = vadd.f32 %v389, %v515
      %v517 = vpop.f32.mrb[0].mxu0
      %518 = vmatprep.mubr.f32.mxu0 0.0
      %519 = vmatmul.mubr.f32.gmra.mrb[0].mxu0 %v401
      %v520 = vpop.f32.mrb[0].mxu0
      %v521 = vadd.f32 %v389, %v520
      %v522 = vpop.f32.mrb[0].mxu0
      %523 = vmatprep.mubr.f32.mxu0 0.0
      %524 = vmatmul.mubr.f32.gmra.mrb[0].mxu0 %v404
      %v525 = vpop.f32.mrb[0].mxu0
      %v526 = vadd.f32 %v389, %v525
      %v527 = vpop.f32.mrb[0].mxu0
      %528 = vmatprep.mubr.f32.mxu0 0.0
      %529 = vmatmul.mubr.f32.gmra.mrb[0].mxu0 %v407
      %v530 = vpop.f32.mrb[0].mxu0
      %v531 = vadd.f32 %v389, %v530
      %v532 = vpop.f32.mrb[0].mxu0
      %533 = vmatprep.mubr.f32.mxu0 0.0
      %534 = vmatmul.mubr.f32.gmra.mrb[0].mxu0 %v410
      %v535 = vpop.f32.mrb[0].mxu0
      %v536 = vadd.f32 %v389, %v535
      %v537 = vpop.f32.mrb[0].mxu0
      %538 = vmatprep.mubr.f32.mxu0 0.0
      %539 = vmatmul.mubr.f32.gmra.mrb[0].mxu0 %v413
      %v540 = vpop.f32.mrb[0].mxu0
      %v541 = vadd.f32 %v389, %v540
      %v542 = vpop.f32.mrb[0].mxu0
      %543 = vmatprep.mubr.f32.mxu0 0.0
      %544 = vmatmul.mubr.f32.gmra.mrb[0].mxu0 %v416
      %v545 = vpop.f32.mrb[0].mxu0
      %v546 = vadd.f32 %v389, %v545
      %v547 = vpop.f32.mrb[0].mxu0
      %548 = vmatprep.mubr.f32.mxu0 0.0
      %549 = vmatmul.mubr.f32.gmra.mrb[0].mxu0 %v419
      %v550 = vpop.f32.mrb[0].mxu0
      %v551 = vadd.f32 %v389, %v550
      %v552 = vpop.f32.mrb[0].mxu0
      %553 = vmatprep.mubr.f32.mxu0 0.0
      %554 = vmatmul.mubr.f32.gmra.mrb[0].mxu0 %v422
      %v555 = vpop.f32.mrb[0].mxu0
      %v556 = vadd.f32 %v389, %v555
      %v557 = vpop.f32.mrb[0].mxu0
      %558 = vmatprep.mubr.f32.mxu0 0.0
      %559 = vmatmul.mubr.f32.gmra.mrb[0].mxu0 %v425
      %v560 = vpop.f32.mrb[0].mxu0
      %v561 = vadd.f32 %v389, %v560
      %v562 = vpop.f32.mrb[0].mxu0
      %563 = vmatprep.mubr.f32.mxu0 0.0
      %564 = vmatmul.mubr.f32.gmra.mrb[0].mxu0 %v428
      %v565 = vpop.f32.mrb[0].mxu0
      %v566 = vadd.f32 %v389, %v565
      %v567 = vpop.f32.mrb[0].mxu0
      %568 = vmatprep.mubr.f32.mxu0 0.0
      %569 = vmatmul.mubr.f32.gmra.mrb[0].mxu0 %v431
      %v570 = vpop.f32.mrb[0].mxu0
      %v571 = vadd.f32 %v389, %v570
      %v572 = vpop.f32.mrb[0].mxu0
      %573 = vmatprep.mubr.f32.mxu0 0.0
      %574 = vmatmul.mubr.f32.gmra.mrb[0].mxu0 %v434
      %v575 = vpop.f32.mrb[0].mxu0
      %v576 = vadd.f32 %v389, %v575
      %v577 = vpop.f32.mrb[0].mxu0
      %578 = vmatprep.mubr.f32.mxu0 0.0
      %579 = vmatmul.mubr.f32.gmra.mrb[0].mxu0 %v437
      %v580 = vpop.f32.mrb[0].mxu0
      %v581 = vadd.f32 %v389, %v580
      %v582 = vpop.f32.mrb[0].mxu0
      %583 = vdwg.mxu0
      %v584 = vtanh.pop %v506
      %v585 = vtanh.pop %v511
      %v586 = vtanh.pop %v516
      %v587 = vtanh.pop %v521
      %v588 = vtanh.pop %v526
      %v589 = vtanh.pop %v531
      %v590 = vtanh.pop %v536
      %v591 = vtanh.pop %v541
      %v592 = vtanh.pop %v546
      %v593 = vtanh.pop %v551
      %v594 = vtanh.pop %v556
      %v595 = vtanh.pop %v561
      %v596 = vtanh.pop %v566
      %v597 = vtanh.pop %v571
      %v598 = vtanh.pop %v576
      %v599 = vtanh.pop %v581
      %v600 = vld [vmem:[%s1 + $0x50] sm:$0xff]
      %v601 = vld [vmem:[%s1 + $0x58] sm:$0xff]
      %v602 = vld [vmem:[%s1 + $0x60] sm:$0xff]
      %v603 = vld [vmem:[%s1 + $0x68] sm:$0xff]
      %v604 = vld [vmem:[%s1 + $0x70] sm:$0xff]
      %v605 = vld [vmem:[%s1 + $0x78] sm:$0xff]
      %v606 = vld [vmem:[%s1 + $0x80] sm:$0xff]
      %v607 = vld [vmem:[%s1 + $0x88] sm:$0xff]
      %v608 = vld [vmem:[%s1 + $0x92] sm:$0x1]
      %v609 = vlaneseq
      %v610 = vshrl.u32 %v609, 7
      %v611 = vsub.s32 0, %v610
      %v612 = vrot.slane %v608, %v611
      %v614 = vsel %vm390, %v584, 0
      %v617 = vsel %vm390, %v585, 0
      %v620 = vsel %vm390, %v586, 0
      %v623 = vsel %vm390, %v587, 0
      %v626 = vsel %vm390, %v588, 0
      %v629 = vsel %vm390, %v589, 0
      %v632 = vsel %vm390, %v590, 0
      %v635 = vsel %vm390, %v591, 0
      %v638 = vsel %vm390, %v592, 0
      %v641 = vsel %vm390, %v593, 0
      %v644 = vsel %vm390, %v594, 0
      %v647 = vsel %vm390, %v595, 0
      %v650 = vsel %vm390, %v596, 0
      %v653 = vsel %vm390, %v597, 0
      %v656 = vsel %vm390, %v598, 0
      %v659 = vsel %vm390, %v599, 0
      %661 = vmatprep.subr.mxu0 0.0
      %662 = vmatpush1.msra.mxu0 %v600
      %663 = vmatprep.subr.mxu0 0.0
      %664 = vmatpush1.msra.mxu0 %v601
      %665 = vmatprep.subr.mxu0 0.0
      %666 = vmatpush1.msra.mxu0 %v602
      %667 = vmatprep.subr.mxu0 0.0
      %668 = vmatpush1.msra.mxu0 %v603
      %669 = vmatprep.subr.mxu0 0.0
      %670 = vmatpush1.msra.mxu0 %v604
      %671 = vmatprep.subr.mxu0 0.0
      %672 = vmatpush1.msra.mxu0 %v605
      %673 = vmatprep.subr.mxu0 0.0
      %674 = vmatpush1.msra.mxu0 %v606
      %675 = vmatprep.subr.mxu0 0.0
      %676 = vmatpush1.msra.mxu0 %v607
      %677 = vmatprep.subr.mxu0 0.0
      %678 = vmatpush1.msra.mxu0 0.0
      %679 = vmatprep.subr.mxu0 0.0
      %680 = vmatpush1.msra.mxu0 0.0
      %681 = vmatprep.subr.mxu0 0.0
      %682 = vmatpush1.msra.mxu0 0.0
      %683 = vmatprep.subr.mxu0 0.0
      %684 = vmatpush1.msra.mxu0 0.0
      %685 = vmatprep.subr.mxu0 0.0
      %686 = vmatpush1.msra.mxu0 0.0
      %687 = vmatprep.subr.mxu0 0.0
      %688 = vmatpush1.msra.mxu0 0.0
      %689 = vmatprep.subr.mxu0 0.0
      %690 = vmatpush1.msra.mxu0 0.0
      %691 = vmatprep.subr.mxu0 0.0
      %692 = vmatpush1.msra.mxu0 0.0
      %693 = vmatprep.subr.mxu0 0.0
      %694 = vmatpush1.msra.mxu0 0.0
      %695 = vmatprep.subr.mxu0 0.0
      %696 = vmatpush1.msra.mxu0 0.0
      %697 = vmatprep.subr.mxu0 0.0
      %698 = vmatpush1.msra.mxu0 0.0
      %699 = vmatprep.subr.mxu0 0.0
      %700 = vmatpush1.msra.mxu0 0.0
      %701 = vmatprep.subr.mxu0 0.0
      %702 = vmatpush1.msra.mxu0 0.0
      %703 = vmatprep.subr.mxu0 0.0
      %704 = vmatpush1.msra.mxu0 0.0
      %705 = vmatprep.subr.mxu0 0.0
      %706 = vmatpush1.msra.mxu0 0.0
      %707 = vmatprep.subr.mxu0 0.0
      %708 = vmatpush1.msra.mxu0 0.0
      %709 = vmatprep.subr.mxu0 0.0
      %710 = vmatpush1.msra.mxu0 0.0
      %711 = vmatprep.subr.mxu0 0.0
      %712 = vmatpush1.msra.mxu0 0.0
      %713 = vmatprep.subr.mxu0 0.0
      %714 = vmatpush1.msra.mxu0 0.0
      %715 = vmatprep.subr.mxu0 0.0
      %716 = vmatpush1.msra.mxu0 0.0
      %717 = vmatprep.subr.mxu0 0.0
      %718 = vmatpush1.msra.mxu0 0.0
      %719 = vmatprep.subr.mxu0 0.0
      %720 = vmatpush1.msra.mxu0 0.0
      %721 = vmatprep.subr.mxu0 0.0
      %722 = vmatpush1.msra.mxu0 0.0
      %723 = vmatprep.subr.mxu0 0.0
      %724 = vmatpush1.msra.mxu0 0.0
      %725 = vmatprep.mubr.f32.mxu0 0.0
      %726 = vmatmul.mubr.f32.gmra.mrb[0].mxu0 %v614
      %v727 = vpop.f32.mrb[0].mxu0
      %v728 = vadd.f32 %v612, %v727
      %v729 = vpop.f32.mrb[0].mxu0
      %730 = vmatprep.mubr.f32.mxu0 0.0
      %731 = vmatmul.mubr.f32.gmra.mrb[0].mxu0 %v617
      %v732 = vpop.f32.mrb[0].mxu0
      %v733 = vadd.f32 %v612, %v732
      %v734 = vpop.f32.mrb[0].mxu0
      %735 = vmatprep.mubr.f32.mxu0 0.0
      %736 = vmatmul.mubr.f32.gmra.mrb[0].mxu0 %v620
      %v737 = vpop.f32.mrb[0].mxu0
      %v738 = vadd.f32 %v612, %v737
      %v739 = vpop.f32.mrb[0].mxu0
      %740 = vmatprep.mubr.f32.mxu0 0.0
      %741 = vmatmul.mubr.f32.gmra.mrb[0].mxu0 %v623
      %v742 = vpop.f32.mrb[0].mxu0
      %v743 = vadd.f32 %v612, %v742
      %v744 = vpop.f32.mrb[0].mxu0
      %745 = vmatprep.mubr.f32.mxu0 0.0
      %746 = vmatmul.mubr.f32.gmra.mrb[0].mxu0 %v626
      %v747 = vpop.f32.mrb[0].mxu0
      %v748 = vadd.f32 %v612, %v747
      %v749 = vpop.f32.mrb[0].mxu0
      %750 = vmatprep.mubr.f32.mxu0 0.0
      %751 = vmatmul.mubr.f32.gmra.mrb[0].mxu0 %v629
      %v752 = vpop.f32.mrb[0].mxu0
      %v753 = vadd.f32 %v612, %v752
      %v754 = vpop.f32.mrb[0].mxu0
      %755 = vmatprep.mubr.f32.mxu0 0.0
      %756 = vmatmul.mubr.f32.gmra.mrb[0].mxu0 %v632
      %v757 = vpop.f32.mrb[0].mxu0
      %v758 = vadd.f32 %v612, %v757
      %v759 = vpop.f32.mrb[0].mxu0
      %760 = vmatprep.mubr.f32.mxu0 0.0
      %761 = vmatmul.mubr.f32.gmra.mrb[0].mxu0 %v635
      %v762 = vpop.f32.mrb[0].mxu0
      %v763 = vadd.f32 %v612, %v762
      %v764 = vpop.f32.mrb[0].mxu0
      %765 = vmatprep.mubr.f32.mxu0 0.0
      %766 = vmatmul.mubr.f32.gmra.mrb[0].mxu0 %v638
      %v767 = vpop.f32.mrb[0].mxu0
      %v768 = vadd.f32 %v612, %v767
      %v769 = vpop.f32.mrb[0].mxu0
      %770 = vmatprep.mubr.f32.mxu0 0.0
      %771 = vmatmul.mubr.f32.gmra.mrb[0].mxu0 %v641
      %v772 = vpop.f32.mrb[0].mxu0
      %v773 = vadd.f32 %v612, %v772
      %v774 = vpop.f32.mrb[0].mxu0
      %775 = vmatprep.mubr.f32.mxu0 0.0
      %776 = vmatmul.mubr.f32.gmra.mrb[0].mxu0 %v644
      %v777 = vpop.f32.mrb[0].mxu0
      %v778 = vadd.f32 %v612, %v777
      %v779 = vpop.f32.mrb[0].mxu0
      %780 = vmatprep.mubr.f32.mxu0 0.0
      %781 = vmatmul.mubr.f32.gmra.mrb[0].mxu0 %v647
      %v782 = vpop.f32.mrb[0].mxu0
      %v783 = vadd.f32 %v612, %v782
      %v784 = vpop.f32.mrb[0].mxu0
      %785 = vmatprep.mubr.f32.mxu0 0.0
      %786 = vmatmul.mubr.f32.gmra.mrb[0].mxu0 %v650
      %v787 = vpop.f32.mrb[0].mxu0
      %v788 = vadd.f32 %v612, %v787
      %v789 = vpop.f32.mrb[0].mxu0
      %790 = vmatprep.mubr.f32.mxu0 0.0
      %791 = vmatmul.mubr.f32.gmra.mrb[0].mxu0 %v653
      %v792 = vpop.f32.mrb[0].mxu0
      %v793 = vadd.f32 %v612, %v792
      %v794 = vpop.f32.mrb[0].mxu0
      %795 = vmatprep.mubr.f32.mxu0 0.0
      %796 = vmatmul.mubr.f32.gmra.mrb[0].mxu0 %v656
      %v797 = vpop.f32.mrb[0].mxu0
      %v798 = vadd.f32 %v612, %v797
      %v799 = vpop.f32.mrb[0].mxu0
      %800 = vmatprep.mubr.f32.mxu0 0.0
      %801 = vmatmul.mubr.f32.gmra.mrb[0].mxu0 %v659
      %v802 = vpop.f32.mrb[0].mxu0
      %v803 = vadd.f32 %v612, %v802
      %v804 = vpop.f32.mrb[0].mxu0
      %805 = vdwg.mxu0
      %v806 = vlaneseq
      %v807 = vshrl.u32 %v806, 7
      %v808 = vadd.s32 %v807, 8
      %v809 = vadd.s32 %v807, 16
      %v810 = vadd.s32 %v807, 24
      %v811 = vadd.s32 %v807, 32
      %v812 = vadd.s32 %v807, 40
      %v813 = vadd.s32 %v807, 48
      %v814 = vadd.s32 %v807, 56
      %v815 = vadd.s32 %v807, 64
      %v816 = vadd.s32 %v807, 72
      %v817 = vadd.s32 %v807, 80
      %v818 = vadd.s32 %v807, 88
      %v819 = vadd.s32 %v807, 96
      %v820 = vadd.s32 %v807, 104
      %v821 = vadd.s32 %v807, 112
      %v822 = vadd.s32 %v807, 120
      %s823 = smul.u32 %s13, 128
      %v824 = vstv %s823
      %v825 = vadd.s32 %v807, %v824
      %v826 = vadd.s32 %v808, %v824
      %v827 = vadd.s32 %v809, %v824
      %v828 = vadd.s32 %v810, %v824
      %v829 = vadd.s32 %v811, %v824
      %v830 = vadd.s32 %v812, %v824
      %v831 = vadd.s32 %v813, %v824
      %v832 = vadd.s32 %v814, %v824
      %v833 = vadd.s32 %v815, %v824
      %v834 = vadd.s32 %v816, %v824
      %v835 = vadd.s32 %v817, %v824
      %v836 = vadd.s32 %v818, %v824
      %v837 = vadd.s32 %v819, %v824
      %v838 = vadd.s32 %v820, %v824
      %v839 = vadd.s32 %v821, %v824
      %v840 = vadd.s32 %v822, %v824
      %vm841 = vcmp.lt.s32.totalorder %v825, 200
      %vm842 = vcmp.lt.s32.totalorder %v826, 200
      %vm843 = vcmp.lt.s32.totalorder %v827, 200
      %vm844 = vcmp.lt.s32.totalorder %v828, 200
      %vm845 = vcmp.lt.s32.totalorder %v829, 200
      %vm846 = vcmp.lt.s32.totalorder %v830, 200
      %vm847 = vcmp.lt.s32.totalorder %v831, 200
      %vm848 = vcmp.lt.s32.totalorder %v832, 200
      %vm849 = vcmp.lt.s32.totalorder %v833, 200
      %vm850 = vcmp.lt.s32.totalorder %v834, 200
      %vm851 = vcmp.lt.s32.totalorder %v835, 200
      %vm852 = vcmp.lt.s32.totalorder %v836, 200
      %vm853 = vcmp.lt.s32.totalorder %v837, 200
      %vm854 = vcmp.lt.s32.totalorder %v838, 200
      %vm855 = vcmp.lt.s32.totalorder %v839, 200
      %vm856 = vcmp.lt.s32.totalorder %v840, 200
      %v857 = vmul.f32 %v728, %v728
      %v858 = vmul.f32 %v733, %v733
      %v859 = vmul.f32 %v738, %v738
      %v860 = vmul.f32 %v743, %v743
      %v861 = vmul.f32 %v748, %v748
      %v862 = vmul.f32 %v753, %v753
      %v863 = vmul.f32 %v758, %v758
      %v864 = vmul.f32 %v763, %v763
      %v865 = vmul.f32 %v768, %v768
      %v866 = vmul.f32 %v773, %v773
      %v867 = vmul.f32 %v778, %v778
      %v868 = vmul.f32 %v783, %v783
      %v869 = vmul.f32 %v788, %v788
      %v870 = vmul.f32 %v793, %v793
      %v871 = vmul.f32 %v798, %v798
      %v872 = vmul.f32 %v803, %v803
      %v873 = vsel %vm841, %v857, 0.0
      %v874 = vsel %vm842, %v858, 0.0
      %v875 = vsel %vm843, %v859, 0.0
      %v876 = vsel %vm844, %v860, 0.0
      %v877 = vsel %vm845, %v861, 0.0
      %v878 = vsel %vm846, %v862, 0.0
      %v879 = vsel %vm847, %v863, 0.0
      %v880 = vsel %vm848, %v864, 0.0
      %v881 = vsel %vm849, %v865, 0.0
      %v882 = vsel %vm850, %v866, 0.0
      %v883 = vsel %vm851, %v867, 0.0
      %v884 = vsel %vm852, %v868, 0.0
      %v885 = vsel %vm853, %v869, 0.0
      %v886 = vsel %vm854, %v870, 0.0
      %v887 = vsel %vm855, %v871, 0.0
      %v888 = vsel %vm856, %v872, 0.0
      %vm889 = vcmask 64512
      %v890 = vsel %vm889, %v873, 0.0
      %v891 = vsel %vm889, %v874, 0.0
      %v892 = vadd.f32 %v890, %v891
      %v893 = vsel %vm889, %v875, 0.0
      %v894 = vadd.f32 %v892, %v893
      %v895 = vsel %vm889, %v876, 0.0
      %v896 = vadd.f32 %v894, %v895
      %v897 = vsel %vm889, %v877, 0.0
      %v898 = vadd.f32 %v896, %v897
      %v899 = vsel %vm889, %v878, 0.0
      %v900 = vadd.f32 %v898, %v899
      %v901 = vsel %vm889, %v879, 0.0
      %v902 = vadd.f32 %v900, %v901
      %v903 = vsel %vm889, %v880, 0.0
      %v904 = vadd.f32 %v902, %v903
      %v905 = vsel %vm889, %v881, 0.0
      %v906 = vadd.f32 %v904, %v905
      %v907 = vsel %vm889, %v882, 0.0
      %v908 = vadd.f32 %v906, %v907
      %v909 = vsel %vm889, %v883, 0.0
      %v910 = vadd.f32 %v908, %v909
      %v911 = vsel %vm889, %v884, 0.0
      %v912 = vadd.f32 %v910, %v911
      %v913 = vsel %vm889, %v885, 0.0
      %v914 = vadd.f32 %v912, %v913
      %v915 = vsel %vm889, %v886, 0.0
      %v916 = vadd.f32 %v914, %v915
      %v917 = vsel %vm889, %v887, 0.0
      %v918 = vadd.f32 %v916, %v917
      %v919 = vsel %vm889, %v888, 0.0
      %v920 = vadd.f32 %v918, %v919
      %921 = vadd.xlane.f32.xlu0 %v920
      %v922 = vpop.xlane.xlu0 %921
      %v923 = vrot.slane %v922, 4
      %v924 = vadd.f32 %v922, %v923
      %v925 = vrot.slane %v924, 2
      %v926 = vadd.f32 %v924, %v925
      %v927 = vrot.slane %v926, 1
      %v928 = vadd.f32 %v926, %v927
      %s929 = vtos %v928
      %v930 = vstv %s929
      %931 = vst [vmem:[%s143] sm:$0xff] %v930
      %p932 = scmp.lt.s32.totalorder %s13, 1
      %s933 = scalar_select %p932, %s13, 1
      %s934 = smul.addr %s933, 8
      %s935 = scalar_lea.vmem %s2, %s934
      // Predicated region
      $region29: #{rnd_forward.1} parent=27 // pred_check
        %p936 = pneg %p78
      $region30: #{rnd_forward.1} parent=27 // pred_check_branch
        %938 = sbr.rel (%p936) target = $region32
      $region31: #{rnd_forward.1} parent=27 // pred_region
        _
      $region32: #{rnd_forward.1} parent=27 // pred_fallthru
        _
    $region28: #{rnd_forward.1} parent=5 // pred_fallthru
      _
    %p939 = scmp.le.s32.totalorder 2, %s8
    // Predicated region
    $region33: #{rnd_forward.1} parent=5 // pred_check
      %p940 = pneg %p939
    $region34: #{rnd_forward.1} parent=5 // pred_check_branch
      %942 = sbr.rel (%p940) target = $region36
    $region35: #{rnd_forward.1} parent=5 // pred_region
      %s943 = ssub.s32 %s8, 2
      // Predicated region
      $region37: #{rnd_forward.1} parent=35 // pred_check
        %p944 = pneg %p84
      $region38: #{rnd_forward.1} parent=35 // pred_check_branch
        %946 = sbr.rel (%p944) target = $region40
      $region39: #{rnd_forward.1} parent=35 // pred_region
        %p947 = scmp.lt.s32.totalorder %s14, 1
        %s948 = scalar_select %p947, %s14, 1
        %s949 = smul.addr %s948, 8
        %s950 = scalar_lea.vmem %s2, %s949
      $region40: #{rnd_forward.1} parent=35 // pred_fallthru
        _
    $region36: #{rnd_forward.1} parent=5 // pred_fallthru
      _
  $region6: #{rnd_forward.1} parent=0 // loop_footer
    %s12 = sadd.s32 1, %s8
  $region7: #{rnd_forward.1} parent=0 // loop_footer_branch
    %7 = sbr.rel target = $region3
  $region8: #{rnd_forward.1} parent=0 // loop_exit
    _

</llo_original>
